<compile_context>
chip_gen: v6e
topology: v6e:2x2x1
jax: 0.10.0
libtpu: 0.0.40
codegen_flags: <defaults>
</compile_context>

<pallas_src>
import jax
import jax.numpy as jnp
from jax.experimental import pallas as pl
from jax.experimental.pallas import tpu as pltpu


def _round_up(n, m):
    return ((n + m - 1) // m) * m


def ann_kernel(x_ref, w1_ref, b1_ref, wht_ref, bht_ref, out_ref):
    # fc0: f32 MXU matmul (compute is nowhere near the bottleneck), bias + ReLU
    # in f32 on the VPU.
    h = jnp.dot(x_ref[...], w1_ref[...], preferred_element_type=jnp.float32)
    h = jnp.maximum(h + b1_ref[...], 0.0)
    # TODO(synk): nn.Dropout(p=0.14) is identity in eval mode; train-mode
    # stochastic masking (pltpu.prng_seed / prng_random_bits, 1/(1-p) scale)
    # is not implemented here.

    # Fused heads, produced directly in transposed (2, tb) lane-dense form:
    #   zt[a, b] = sum_k wht[a, k] * h[b, k]      (rhs-transposed matmul on MXU)
    zt = jax.lax.dot_general(
        wht_ref[...], h,
        dimension_numbers=(((1,), (1,)), ((), ())),
        preferred_element_type=jnp.float32,
    ) + bht_ref[...]                               # (2, tb)

    # Row 0: numerically stable sigmoid (exact reciprocal; exp only on B elems).
    cls = zt[0:1, :]
    e = jnp.exp(-jnp.abs(cls))
    r = 1.0 / (1.0 + e)
    out_ref[0:1, :] = jnp.where(cls >= 0.0, r, e * r)
    # Row 1: regression output, passed through untouched.
    out_ref[1:2, :] = zt[1:2, :]


def fuse_head_params(w_cls, b_cls, w_reg, b_reg):
    """One-time (init-time) fusion of the two 1-wide heads into (2, H) / (2, 1)."""
    w_heads_t = jnp.concatenate([w_cls, w_reg], axis=1).T.astype(jnp.float32)  # (2, H)
    b_heads_t = jnp.concatenate([b_cls, b_reg], axis=1).T.astype(jnp.float32)  # (2, 1)
    return w_heads_t, b_heads_t


def ann_forward(x, w1, b1, w_heads_t, b_heads_t, *, block_rows=4096):
    B, F = x.shape
    H = w1.shape[1]

    # Tile choice:
    #   * small B: one block equal to the full array (always layout-legal).
    #   * large B: >=2 grid steps (feeds both v7x TensorCores) with 128-row
    #     multiples, so the (2, tb) output block stays lane-aligned and the
    #     (tb, F) x block stays sublane-aligned even when B % tb != 0.
    if B <= 256:
        tb = B
    else:
        tb = min(block_rows, _round_up(pl.cdiv(B, 2), 128))
    grid = (pl.cdiv(B, tb),)

    cost = pl.CostEstimate(
        flops=2 * B * F * H + 2 * B * H * 2,
        transcendentals=B,  # one exp per sample (classification row only)
        bytes_accessed=(B * F * 4 + F * H * 4 + H * 4
                        + 2 * H * 4 + 2 * 4 + 2 * B * 4),
    )

    out_t = pl.pallas_call(
        ann_kernel,
        out_shape=jax.ShapeDtypeStruct((2, B), jnp.float32),
        grid=grid,
        in_specs=[
            pl.BlockSpec((tb, F), lambda i: (i, 0)),   # x tile, streamed f32
            pl.BlockSpec((F, H), lambda i: (0, 0)),    # W1, resident
            pl.BlockSpec((1, H), lambda i: (0, 0)),    # b1, resident
            pl.BlockSpec((2, H), lambda i: (0, 0)),    # fused head weights (T)
            pl.BlockSpec((2, 1), lambda i: (0, 0)),    # fused head bias (T)
        ],
        out_specs=pl.BlockSpec((2, tb), lambda i: (0, i)),   # lane-dense (2, B)
        compiler_params=pltpu.CompilerParams(
            dimension_semantics=("parallel",),
            vmem_limit_bytes=32 * 1024 * 1024,
        ),
        cost_estimate=cost,
    )(x.astype(jnp.float32), w1, b1, w_heads_t, b_heads_t)

    o_cls = out_t[0:1, :].T   # (B, 1)
    o_reg = out_t[1:2, :].T   # (B, 1)
    return o_cls, o_reg


def init_params(key, in_features, hidden):
    # Mirrors ANN._initialize_weights for Linear layers:
    #   weight ~ Normal(0, 0.01), bias = 0.  Weights stored pre-transposed
    #   as (in, out) so the kernel computes x @ W directly on the MXU.
    k1, k2, k3 = jax.random.split(key, 3)
    w1 = 0.01 * jax.random.normal(k1, (in_features, hidden), jnp.float32)
    b1 = jnp.zeros((1, hidden), jnp.float32)
    w_cls = 0.01 * jax.random.normal(k2, (hidden, 1), jnp.float32)
    b_cls = jnp.zeros((1, 1), jnp.float32)
    w_reg = 0.01 * jax.random.normal(k3, (hidden, 1), jnp.float32)
    b_reg = jnp.zeros((1, 1), jnp.float32)
    return w1, b1, w_cls, b_cls, w_reg, b_reg


if __name__ == "__main__":
    # Small shapes consistent with ANN(in_features=..., out_units=[16], n_out=1).
    batch, in_features, hidden = 8, 128, 16

    key = jax.random.PRNGKey(0)
    kx, kp = jax.random.split(key)
    x = jax.random.normal(kx, (batch, in_features), jnp.float32)
    w1, b1, w_cls, b_cls, w_reg, b_reg = init_params(kp, in_features, hidden)

    # Constant weight prep done once, outside the forward pass.
    w_heads_t, b_heads_t = fuse_head_params(w_cls, b_cls, w_reg, b_reg)

    o_cls, o_reg = ann_forward(x, w1, b1, w_heads_t, b_heads_t)
    jax.block_until_ready((o_cls, o_reg))

    # Pure-JAX f32 reference (HIGHEST precision so both sides are ~exact f32).
    hp = jax.lax.Precision.HIGHEST
    h_ref = jnp.maximum(jnp.dot(x, w1, precision=hp) + b1, 0.0)
    ocls_ref = jax.nn.sigmoid(jnp.dot(h_ref, w_cls, precision=hp) + b_cls)
    oreg_ref = jnp.dot(h_ref, w_reg, precision=hp) + b_reg

    assert o_cls.shape == (batch, 1) and o_reg.shape == (batch, 1)
    assert jnp.allclose(o_cls, ocls_ref, atol=2e-4, rtol=2e-3)
    assert jnp.allclose(o_reg, oreg_ref, atol=2e-4, rtol=2e-3)

    print("KERNEL_OK")
</pallas_src>

<mosaic_0001>
module attributes {stable_mosaic.version = 11 : i64} {
  func.func @ann_kernel(%arg0: i32, %arg1: memref<8x128xf32, #tpu.memory_space<vmem>>, %arg2: memref<128x16xf32, #tpu.memory_space<vmem>>, %arg3: memref<1x16xf32, #tpu.memory_space<vmem>>, %arg4: memref<2x16xf32, #tpu.memory_space<vmem>>, %arg5: memref<2x1xf32, #tpu.memory_space<vmem>>, %arg6: memref<2x8xf32, #tpu.memory_space<vmem>>) attributes {dimension_semantics = [#tpu.dimension_semantics<parallel>], iteration_bounds = array<i64: 1>, scalar_prefetch = 0 : i64, scratch_operands = 0 : i64, tpu.core_type = #tpu.core_type<tc>, window_params = [{transform_indices = @transform_0, window_bounds = array<i64: 8, 128>}, {pipeline_mode = #tpu.pipeline_mode<synchronous>, transform_indices = @transform_1, window_bounds = array<i64: 128, 16>}, {pipeline_mode = #tpu.pipeline_mode<synchronous>, transform_indices = @transform_2, window_bounds = array<i64: 1, 16>}, {pipeline_mode = #tpu.pipeline_mode<synchronous>, transform_indices = @transform_3, window_bounds = array<i64: 2, 16>}, {pipeline_mode = #tpu.pipeline_mode<synchronous>, transform_indices = @transform_4, window_bounds = array<i64: 2, 1>}, {transform_indices = @transform_5, window_bounds = array<i64: 2, 8>}]} {
    %c0 = arith.constant 0 : index
    %c0_0 = arith.constant 0 : index
    %0 = vector.load %arg1[%c0, %c0_0] : memref<8x128xf32, #tpu.memory_space<vmem>>, vector<8x128xf32>
    %c0_1 = arith.constant 0 : index
    %c0_2 = arith.constant 0 : index
    %1 = vector.load %arg2[%c0_1, %c0_2] : memref<128x16xf32, #tpu.memory_space<vmem>>, vector<128x16xf32>
    %cst = arith.constant dense<0.000000e+00> : vector<8x16xf32>
    %2 = tpu.matmul %0, %1, %cst {dimension_numbers = #tpu.dot_dimension_numbers<[1], [0], [0], [1], [0, 0, 1, 1], [], []>} : vector<8x128xf32>, vector<128x16xf32>, vector<8x16xf32> -> vector<8x16xf32>
    %c0_3 = arith.constant 0 : index
    %c0_4 = arith.constant 0 : index
    %3 = vector.load %arg3[%c0_3, %c0_4] : memref<1x16xf32, #tpu.memory_space<vmem>>, vector<1x16xf32>
    %4 = vector.broadcast %3 : vector<1x16xf32> to vector<8x16xf32>
    %5 = arith.addf %2, %4 : vector<8x16xf32>
    %cst_5 = arith.constant 0.000000e+00 : f32
    %6 = vector.broadcast %cst_5 : f32 to vector<8x16xf32>
    %7 = arith.maximumf %5, %6 : vector<8x16xf32>
    %c0_6 = arith.constant 0 : index
    %c0_7 = arith.constant 0 : index
    %8 = vector.load %arg4[%c0_6, %c0_7] : memref<2x16xf32, #tpu.memory_space<vmem>>, vector<2x16xf32>
    %cst_8 = arith.constant dense<0.000000e+00> : vector<2x8xf32>
    %9 = tpu.matmul %8, %7, %cst_8 {dimension_numbers = #tpu.dot_dimension_numbers<[1], [1], [0], [0], [0, 0, 1, 0], [], []>} : vector<2x16xf32>, vector<8x16xf32>, vector<2x8xf32> -> vector<2x8xf32>
    %c0_9 = arith.constant 0 : index
    %c0_10 = arith.constant 0 : index
    %10 = vector.load %arg5[%c0_9, %c0_10] : memref<2x1xf32, #tpu.memory_space<vmem>>, vector<2x1xf32>
    %11 = vector.broadcast %10 : vector<2x1xf32> to vector<2x8xf32>
    %12 = arith.addf %9, %11 : vector<2x8xf32>
    %13 = vector.extract_strided_slice %12 {offsets = [0, 0], sizes = [1, 8], strides = [1, 1]} : vector<2x8xf32> to vector<1x8xf32>
    %14 = math.absf %13 : vector<1x8xf32>
    %cst_11 = arith.constant 0.000000e+00 : f32
    %15 = vector.broadcast %cst_11 : f32 to vector<1x8xf32>
    %16 = arith.subf %15, %14 : vector<1x8xf32>
    %17 = math.exp %16 : vector<1x8xf32>
    %cst_12 = arith.constant 1.000000e+00 : f32
    %18 = vector.broadcast %cst_12 : f32 to vector<1x8xf32>
    %19 = arith.addf %18, %17 : vector<1x8xf32>
    %cst_13 = arith.constant 1.000000e+00 : f32
    %20 = vector.broadcast %cst_13 : f32 to vector<1x8xf32>
    %21 = arith.divf %20, %19 : vector<1x8xf32>
    %cst_14 = arith.constant 0.000000e+00 : f32
    %22 = vector.broadcast %cst_14 : f32 to vector<1x8xf32>
    %23 = arith.cmpf oge, %13, %22 : vector<1x8xf32>
    %24 = arith.mulf %17, %21 : vector<1x8xf32>
    %25 = arith.select %23, %21, %24 : vector<1x8xi1>, vector<1x8xf32>
    %c0_15 = arith.constant 0 : index
    %c0_16 = arith.constant 0 : index
    %26 = vector.load %arg6[%c0_15, %c0_16] : memref<2x8xf32, #tpu.memory_space<vmem>>, vector<1x8xf32>
    tpu.vector_store %arg6[%c0_15, %c0_16], %25 {strides = array<i32>} : memref<2x8xf32, #tpu.memory_space<vmem>>, vector<1x8xf32>,
    %27 = vector.extract_strided_slice %12 {offsets = [1, 0], sizes = [1, 8], strides = [1, 1]} : vector<2x8xf32> to vector<1x8xf32>
    %c1 = arith.constant 1 : index
    %c0_17 = arith.constant 0 : index
    %28 = vector.load %arg6[%c1, %c0_17] : memref<2x8xf32, #tpu.memory_space<vmem>>, vector<1x8xf32>
    tpu.vector_store %arg6[%c1, %c0_17], %27 {strides = array<i32>} : memref<2x8xf32, #tpu.memory_space<vmem>>, vector<1x8xf32>,
    return
  }
  func.func @transform_0(%arg0: i32) -> (i32, i32) {
    %c0_i32 = arith.constant 0 : i32
    %c0_i32_0 = arith.constant 0 : i32
    return %arg0, %c0_i32 : i32, i32
  }
  func.func @transform_1(%arg0: i32) -> (i32, i32) {
    %c0_i32 = arith.constant 0 : i32
    %c0_i32_0 = arith.constant 0 : i32
    %c0_i32_1 = arith.constant 0 : i32
    return %c0_i32, %c0_i32_0 : i32, i32
  }
  func.func @transform_2(%arg0: i32) -> (i32, i32) {
    %c0_i32 = arith.constant 0 : i32
    %c0_i32_0 = arith.constant 0 : i32
    %c0_i32_1 = arith.constant 0 : i32
    return %c0_i32, %c0_i32_0 : i32, i32
  }
  func.func @transform_3(%arg0: i32) -> (i32, i32) {
    %c0_i32 = arith.constant 0 : i32
    %c0_i32_0 = arith.constant 0 : i32
    %c0_i32_1 = arith.constant 0 : i32
    return %c0_i32, %c0_i32_0 : i32, i32
  }
  func.func @transform_4(%arg0: i32) -> (i32, i32) {
    %c0_i32 = arith.constant 0 : i32
    %c0_i32_0 = arith.constant 0 : i32
    %c0_i32_1 = arith.constant 0 : i32
    return %c0_i32, %c0_i32_0 : i32, i32
  }
  func.func @transform_5(%arg0: i32) -> (i32, i32) {
    %c0_i32 = arith.constant 0 : i32
    %c0_i32_0 = arith.constant 0 : i32
    return %c0_i32, %arg0 : i32, i32
  }
}

</mosaic_0001>

<llo_original>
// kernel: tpu_custom_call.1
$region0: #{tpu_custom_call.1}
  #allocation0 [shape = 'u32[]', space=smem, size = 0x4, offset = 0x4, fixed_abs, tag = 'smem constant byte address 0x4 - core index']
  #allocation1 [shape = 'u32[144,128]{1,0:T(1,128)}', space=vmem, size = 0x12000, scoped, tag = 'internal scratch']
  %s0 = inlined_call_operand.vmem [shape: f32[8,128], index: 0, kind: input, shape index: {}]
  %s1 = inlined_call_operand.vmem [shape: f32[128,16], index: 1, kind: input, shape index: {}]
  %s2 = inlined_call_operand.vmem [shape: f32[1,16], index: 2, kind: input, shape index: {}]
  %s3 = inlined_call_operand.vmem [shape: f32[2,16], index: 3, kind: input, shape index: {}]
  %s4 = inlined_call_operand.vmem [shape: f32[2,1], index: 4, kind: input, shape index: {}]
  %s5 = inlined_call_operand.hbm [shape: f32[2,8], index: 5, kind: output, shape index: {}]
  %s6 = sld [smem:[#allocation0]]
  $region30: #{tpu_custom_call.1} parent=0
    _
  %s8 = ssub.s32 1, %s6
  %s9 = scalar_select 0, %s8, %s6
  $region1: #{tpu_custom_call.1} parent=0
    #allocation2 [shape = 'u8[1024]{0}', space=vmem, size = 0x400, scoped, tag = 'output window, operand 0, single buffered']
    #allocation3 [shape = 's32[1]{0}', space=sflag, size = 0x4, scoped, tag = 'scoped memory for tpu_custom_call.1']
    %10 = vsyncpa [#allocation3], 0
    // Predicated region
    $region2: #{tpu_custom_call.1} parent=1 // pred_check
      _
    $region3: #{tpu_custom_call.1} parent=1 // pred_check_branch
      %12 = sbr.rel (0) target = $region5
    $region4: #{tpu_custom_call.1} parent=1 // pred_region
      _
    $region5: #{tpu_custom_call.1} parent=1 // pred_fallthru
      _
    // Predicated region
    $region6: #{tpu_custom_call.1} parent=1 // pred_check
      _
    $region7: #{tpu_custom_call.1} parent=1 // pred_check_branch
      %14 = sbr.rel (0) target = $region9
    $region8: #{tpu_custom_call.1} parent=1 // pred_region
      _
    $region9: #{tpu_custom_call.1} parent=1 // pred_fallthru
      _
    // Predicated region
    $region10: #{tpu_custom_call.1} parent=1 // pred_check
      _
    $region11: #{tpu_custom_call.1} parent=1 // pred_check_branch
      %16 = sbr.rel (0) target = $region13
    $region12: #{tpu_custom_call.1} parent=1 // pred_region
      _
    $region13: #{tpu_custom_call.1} parent=1 // pred_fallthru
      _
    // Predicated region
    $region14: #{tpu_custom_call.1} parent=1 // pred_check
      _
    $region15: #{tpu_custom_call.1} parent=1 // pred_check_branch
      %18 = sbr.rel (0) target = $region17
    $region16: #{tpu_custom_call.1} parent=1 // pred_region
      _
    $region17: #{tpu_custom_call.1} parent=1 // pred_fallthru
      _
    // Predicated region
    $region18: #{tpu_custom_call.1} parent=1 // pred_check
      _
    $region19: #{tpu_custom_call.1} parent=1 // pred_check_branch
      %20 = sbr.rel (0) target = $region21
    $region20: #{tpu_custom_call.1} parent=1 // pred_region
      _
    $region21: #{tpu_custom_call.1} parent=1 // pred_fallthru
      _
    %v21 = vld [vmem:[%s0] sm:$0xff]
    %v22 = vld [vmem:[%s1] sm:$0xff]
    %v23 = vld [vmem:[%s1 + $0x8] sm:$0xff]
    %v24 = vld [vmem:[%s1 + $0x10] sm:$0xff]
    %v25 = vld [vmem:[%s1 + $0x18] sm:$0xff]
    %v26 = vld [vmem:[%s1 + $0x20] sm:$0xff]
    %v27 = vld [vmem:[%s1 + $0x28] sm:$0xff]
    %v28 = vld [vmem:[%s1 + $0x30] sm:$0xff]
    %v29 = vld [vmem:[%s1 + $0x38] sm:$0xff]
    %v30 = vld [vmem:[%s1 + $0x40] sm:$0xff]
    %v31 = vld [vmem:[%s1 + $0x48] sm:$0xff]
    %v32 = vld [vmem:[%s1 + $0x50] sm:$0xff]
    %v33 = vld [vmem:[%s1 + $0x58] sm:$0xff]
    %v34 = vld [vmem:[%s1 + $0x60] sm:$0xff]
    %v35 = vld [vmem:[%s1 + $0x68] sm:$0xff]
    %v36 = vld [vmem:[%s1 + $0x70] sm:$0xff]
    %v37 = vld [vmem:[%s1 + $0x78] sm:$0xff]
    %v38 = vld [vmem:[%s2] sm:$0x1]
    %v40 = vlaneseq
    %v41 = vshrl.u32 %v40, 7
    %v42 = vsub.s32 0, %v41
    %v43 = vrot.slane %v38, %v42
    %45 = vmatprep.subr.mxu0 0.0
    %46 = vmatpush1.msra.mxu0 %v37
    %47 = vmatprep.subr.mxu0 0.0
    %48 = vmatpush1.msra.mxu0 %v36
    %49 = vmatprep.subr.mxu0 0.0
    %50 = vmatpush1.msra.mxu0 %v35
    %51 = vmatprep.subr.mxu0 0.0
    %52 = vmatpush1.msra.mxu0 %v34
    %53 = vmatprep.subr.mxu0 0.0
    %54 = vmatpush1.msra.mxu0 %v33
    %55 = vmatprep.subr.mxu0 0.0
    %56 = vmatpush1.msra.mxu0 %v32
    %57 = vmatprep.subr.mxu0 0.0
    %58 = vmatpush1.msra.mxu0 %v31
    %59 = vmatprep.subr.mxu0 0.0
    %60 = vmatpush1.msra.mxu0 %v30
    %61 = vmatprep.subr.mxu0 0.0
    %62 = vmatpush1.msra.mxu0 %v29
    %63 = vmatprep.subr.mxu0 0.0
    %64 = vmatpush1.msra.mxu0 %v28
    %65 = vmatprep.subr.mxu0 0.0
    %66 = vmatpush1.msra.mxu0 %v27
    %67 = vmatprep.subr.mxu0 0.0
    %68 = vmatpush1.msra.mxu0 %v26
    %69 = vmatprep.subr.mxu0 0.0
    %70 = vmatpush1.msra.mxu0 %v25
    %71 = vmatprep.subr.mxu0 0.0
    %72 = vmatpush1.msra.mxu0 %v24
    %73 = vmatprep.subr.mxu0 0.0
    %74 = vmatpush1.msra.mxu0 %v23
    %75 = vmatprep.subr.mxu0 0.0
    %76 = vmatpush1.msra.mxu0 %v22
    %77 = vmatprep.subr.mxu0 0.0
    %78 = vmatpush2.msra.mxu0 0.0
    %79 = vmatprep.subr.mxu0 0.0
    %80 = vmatpush2.msra.mxu0 0.0
    %81 = vmatprep.subr.mxu0 0.0
    %82 = vmatpush2.msra.mxu0 0.0
    %83 = vmatprep.subr.mxu0 0.0
    %84 = vmatpush2.msra.mxu0 0.0
    %85 = vmatprep.subr.mxu0 0.0
    %86 = vmatpush2.msra.mxu0 0.0
    %87 = vmatprep.subr.mxu0 0.0
    %88 = vmatpush2.msra.mxu0 0.0
    %89 = vmatprep.subr.mxu0 0.0
    %90 = vmatpush2.msra.mxu0 0.0
    %91 = vmatprep.subr.mxu0 0.0
    %92 = vmatpush2.msra.mxu0 0.0
    %93 = vmatprep.subr.mxu0 0.0
    %94 = vmatpush2.msra.mxu0 0.0
    %95 = vmatprep.subr.mxu0 0.0
    %96 = vmatpush2.msra.mxu0 0.0
    %97 = vmatprep.subr.mxu0 0.0
    %98 = vmatpush2.msra.mxu0 0.0
    %99 = vmatprep.subr.mxu0 0.0
    %100 = vmatpush2.msra.mxu0 0.0
    %101 = vmatprep.subr.mxu0 0.0
    %102 = vmatpush2.msra.mxu0 0.0
    %103 = vmatprep.subr.mxu0 0.0
    %104 = vmatpush2.msra.mxu0 0.0
    %105 = vmatprep.subr.mxu0 0.0
    %106 = vmatpush2.msra.mxu0 0.0
    %107 = vmatprep.subr.mxu0 0.0
    %108 = vmatpush2.msra.mxu0 0.0
    %109 = vmatprep.mubr.f32.mxu0 0.0
    %110 = vmatmul.mubr.f32.gmra.mxu0 %v21
    %v111 = vpop.f32.mrf.mxu0
    %v112 = vadd.f32 %v43, %v111
    %v113 = vpop.f32.mrf.mxu0
    %114 = vdwg.mxu0
    %v115 = vmax.f32 %v112, 0.0
    %v116 = vld [vmem:[%s3] sm:$0x3]
    %v117 = vld [vmem:[%s4] sm:$0x3]
    %119 = vset.pattern.permute.xlu0 0
    %120 = vperm.xlu0 %119, %v117
    %v121 = vpop.permute.xlu0 %120
    %vm123 = vcmask 130048
    %v125 = vsel %vm123, %v116, 0
    %v128 = vsel %vm123, %v115, 0
    %130 = vmatprep.subr.mxu0 0.0
    %131 = vmatpush1.xpose.msra.mxu0 0.0
    %132 = vmatprep.subr.mxu0 0.0
    %133 = vmatpush1.xpose.msra.mxu0 0.0
    %134 = vmatprep.subr.mxu0 0.0
    %135 = vmatpush1.xpose.msra.mxu0 0.0
    %136 = vmatprep.subr.mxu0 0.0
    %137 = vmatpush1.xpose.msra.mxu0 0.0
    %138 = vmatprep.subr.mxu0 0.0
    %139 = vmatpush1.xpose.msra.mxu0 0.0
    %140 = vmatprep.subr.mxu0 0.0
    %141 = vmatpush1.xpose.msra.mxu0 0.0
    %142 = vmatprep.subr.mxu0 0.0
    %143 = vmatpush1.xpose.msra.mxu0 0.0
    %144 = vmatprep.subr.mxu0 0.0
    %145 = vmatpush1.xpose.msra.mxu0 0.0
    %146 = vmatprep.subr.mxu0 0.0
    %147 = vmatpush1.xpose.msra.mxu0 0.0
    %148 = vmatprep.subr.mxu0 0.0
    %149 = vmatpush1.xpose.msra.mxu0 0.0
    %150 = vmatprep.subr.mxu0 0.0
    %151 = vmatpush1.xpose.msra.mxu0 0.0
    %152 = vmatprep.subr.mxu0 0.0
    %153 = vmatpush1.xpose.msra.mxu0 0.0
    %154 = vmatprep.subr.mxu0 0.0
    %155 = vmatpush1.xpose.msra.mxu0 0.0
    %156 = vmatprep.subr.mxu0 0.0
    %157 = vmatpush1.xpose.msra.mxu0 0.0
    %158 = vmatprep.subr.mxu0 0.0
    %159 = vmatpush1.xpose.msra.mxu0 0.0
    %160 = vmatprep.subr.mxu0 0.0
    %161 = vmatpush1.xpose.msra.mxu0 %v128
    %162 = vmatprep.subr.mxu0 0.0
    %163 = vmatpush2.xpose.msra.mxu0 0.0
    %164 = vmatprep.subr.mxu0 0.0
    %165 = vmatpush2.xpose.msra.mxu0 0.0
    %166 = vmatprep.subr.mxu0 0.0
    %167 = vmatpush2.xpose.msra.mxu0 0.0
    %168 = vmatprep.subr.mxu0 0.0
    %169 = vmatpush2.xpose.msra.mxu0 0.0
    %170 = vmatprep.subr.mxu0 0.0
    %171 = vmatpush2.xpose.msra.mxu0 0.0
    %172 = vmatprep.subr.mxu0 0.0
    %173 = vmatpush2.xpose.msra.mxu0 0.0
    %174 = vmatprep.subr.mxu0 0.0
    %175 = vmatpush2.xpose.msra.mxu0 0.0
    %176 = vmatprep.subr.mxu0 0.0
    %177 = vmatpush2.xpose.msra.mxu0 0.0
    %178 = vmatprep.subr.mxu0 0.0
    %179 = vmatpush2.xpose.msra.mxu0 0.0
    %180 = vmatprep.subr.mxu0 0.0
    %181 = vmatpush2.xpose.msra.mxu0 0.0
    %182 = vmatprep.subr.mxu0 0.0
    %183 = vmatpush2.xpose.msra.mxu0 0.0
    %184 = vmatprep.subr.mxu0 0.0
    %185 = vmatpush2.xpose.msra.mxu0 0.0
    %186 = vmatprep.subr.mxu0 0.0
    %187 = vmatpush2.xpose.msra.mxu0 0.0
    %188 = vmatprep.subr.mxu0 0.0
    %189 = vmatpush2.xpose.msra.mxu0 0.0
    %190 = vmatprep.subr.mxu0 0.0
    %191 = vmatpush2.xpose.msra.mxu0 0.0
    %192 = vmatprep.subr.mxu0 0.0
    %193 = vmatpush2.xpose.msra.mxu0 0.0
    %194 = vmatprep.mubr.f32.mxu0 0.0
    %195 = vmatmul.mubr.f32.gmra.mxu0 %v125
    %v196 = vpop.f32.mrf.mxu0
    %v197 = vadd.f32 %v121, %v196
    %v198 = vpop.f32.mrf.mxu0
    %199 = vdwg.mxu0
    %v200 = vand.u32 2147483647, %v197
    %v201 = vsub.f32 0.0, %v200
    %v202 = vmul.f32 %v201, 1.442695
    %v203 = vpow.pop %v202
    %v204 = vadd.f32 %v203, 1.0
    %v205 = vrcp.pop %v204
    %v206 = vmul.f32 1.0, %v205
    %vm207 = vcmp.ge.f32.partialorder %v197, 0.0
    %v208 = vmul.f32 %v203, %v206
    %v209 = vsel %vm207, %v206, %v208
    %vm210 = vcmask 57344
    %211 = vst.msk [vmem:[#allocation2] sm:$0x1] %vm210, %v209
    %vm212 = vcmask 58369
    %213 = vst.msk [vmem:[#allocation2] sm:$0x2] %vm212, %v197
    // Predicated region
    $region22: #{tpu_custom_call.1} parent=1 // pred_check
      _
    $region23: #{tpu_custom_call.1} parent=1 // pred_check_branch
      %215 = sbr.rel (0) target = $region25
    $region24: #{tpu_custom_call.1} parent=1 // pred_region
      %s217 = ssub.s32 32, 32
      %218 = vsyncadd [#allocation3], %s217
      %s220 = sshll.u32 [#allocation2], 4
      %s221 = int_to_ptr.vmem [resolvable:$true] %s220
      %223 = dma.vmem_to_hbm [thread:$0]  %s221, 32, %s5, [#allocation3]
    $region25: #{tpu_custom_call.1} parent=1 // pred_fallthru
      _
    // Predicated region
    $region26: #{tpu_custom_call.1} parent=1 // pred_check
      _
    $region27: #{tpu_custom_call.1} parent=1 // pred_check_branch
      %225 = sbr.rel (0) target = $region29
    $region28: #{tpu_custom_call.1} parent=1 // pred_region
      %226 = dma.done [#allocation3], 32
    $region29: #{tpu_custom_call.1} parent=1 // pred_fallthru
      _
    %227 = vsyncpa [#allocation3], 1

</llo_original>
